<compile_context>
chip_gen: v7x
topology: tpu7x:2x2x1
jax: 0.10.0
libtpu: 0.0.40
codegen_flags: <defaults>
</compile_context>

<pallas_src>
import functools

import jax
import jax.numpy as jnp
from jax.experimental import pallas as pl
from jax.experimental.pallas import tpu as pltpu

_LANES = 128
_VMEM_LIMIT = 32 * 1024 * 1024  # safe on v5e/v6e/v7x scoped-VMEM budgets


def _round_up(x, m):
    return ((x + m - 1) // m) * m


# ----------------------------------------------------------------------------
# masked_gaussian_nll_3d:
#   nll = 0.5*log(2*pi) + log(std) + (mu - x)^2 / (2*std^2); out = nll * mask
# Elementwise VPU/EUP kernel over a lane-dense (rows, 128) slab.
# ----------------------------------------------------------------------------
def _nll_kernel(x_ref, mu_ref, std_ref, mask_ref, out_ref):
    x = x_ref[...]
    mu = mu_ref[...]
    std = std_ref[...]
    mask = mask_ref[...]
    half_log_2pi = 0.5 * jnp.log(2.0 * jnp.pi)
    inv_std = pl.reciprocal(std)            # EUP; exact (approx=False)
    d = (mu - x) * inv_std
    nll = half_log_2pi + jnp.log(std) + 0.5 * d * d
    out_ref[...] = nll * mask


def masked_gaussian_nll_3d(x, mu, std, mask, *, max_block_rows=1024):
    B, T, D = x.shape
    total = B * T * D
    rows = pl.cdiv(total, _LANES)
    rows8 = _round_up(rows, 8)
    block_rows = min(max_block_rows, rows8)           # multiple of 8
    padded_rows = _round_up(rows, block_rows)
    padded_total = padded_rows * _LANES

    def flat_pad(a, fill):
        af = a.reshape(-1)
        af = jnp.pad(af, (0, padded_total - total), constant_values=fill)
        return af.reshape(padded_rows, _LANES)

    # std padded with 1.0 keeps log/reciprocal finite in the (discarded) tail.
    x2 = flat_pad(x, 0.0)
    mu2 = flat_pad(mu, 0.0)
    std2 = flat_pad(std, 1.0)
    mask2 = flat_pad(mask, 0.0)

    spec = pl.BlockSpec((block_rows, _LANES), lambda i: (i, 0))
    out = pl.pallas_call(
        _nll_kernel,
        out_shape=jax.ShapeDtypeStruct((padded_rows, _LANES), x.dtype),
        grid=(padded_rows // block_rows,),
        in_specs=[spec, spec, spec, spec],
        out_specs=spec,
        compiler_params=pltpu.CompilerParams(
            dimension_semantics=("parallel",),
            vmem_limit_bytes=_VMEM_LIMIT,
        ),
    )(x2, mu2, std2, mask2)
    return out.reshape(-1)[:total].reshape(B, T, D)


# ----------------------------------------------------------------------------
# get_masks:
#   m_t   = (flip(cumsum(flip(M.sum(-1), 1), 1), 1) > 1.0) * 1   # (B, T)
#   m_g_t = (m_t.sum(-1) > 1) * 1.0                              # (B,)
#   lens  = m_t.sum(-1)                                          # (B,)
# The kernel produces m_t only (batch-tiled, pipelined); m_g_t / lens are one
# cheap XLA reduce in the wrapper.  The reverse-time cumulative sum
# rc[b,t] = sum_{s>=t} msum[b,s] is computed with a VPU compare-mask-reduce
# (no MXU, no TxT matmul drain).  T is small for this model (clinical visits).
# ----------------------------------------------------------------------------
def _masks_kernel(m_ref, mt_ref):
    M = m_ref[...]                                    # (tb, T, D)
    msum = jnp.sum(M, axis=-1)                        # (tb, T)
    T = msum.shape[1]
    t_idx = jax.lax.broadcasted_iota(jnp.int32, (T, T), 0)   # row: output time t
    s_idx = jax.lax.broadcasted_iota(jnp.int32, (T, T), 1)   # col: source time s
    W = (s_idx >= t_idx).astype(jnp.float32)          # W[t, s] = 1 iff s >= t
    # rc[b, t] = sum_s msum[b, s] * W[t, s]  == reverse cumsum along time (VPU+XLU)
    rc = jnp.sum(msum[:, None, :] * W[None, :, :], axis=-1)  # (tb, T)
    mt_ref[...] = (rc > 1.0).astype(mt_ref.dtype)


def get_masks(M, *, batch_block=8):
    B, T, D = M.shape
    if B <= batch_block:
        tb, Bp = B, B
        Mp = M
    else:
        tb = batch_block                              # multiple of 8 => valid sublane block
        Bp = _round_up(B, tb)
        Mp = jnp.pad(M, ((0, Bp - B), (0, 0), (0, 0)))  # zero rows -> m_t == 0 (discarded)

    m_t = pl.pallas_call(
        _masks_kernel,
        out_shape=jax.ShapeDtypeStruct((Bp, T), jnp.int32),
        grid=(Bp // tb,),
        in_specs=[pl.BlockSpec((tb, T, D), lambda b: (b, 0, 0))],
        out_specs=pl.BlockSpec((tb, T), lambda b: (b, 0)),
        compiler_params=pltpu.CompilerParams(
            dimension_semantics=("parallel",),
            vmem_limit_bytes=_VMEM_LIMIT,
        ),
    )(Mp)
    m_t = m_t[:B]
    lens = jnp.sum(m_t, axis=-1)                      # (B,)
    m_g_t = (lens > 1).astype(jnp.float32)            # (B,)
    return m_t, m_g_t, lens


# ----------------------------------------------------------------------------
# apply_reg: l1 -> sum(|p|), l2 -> sum(p**2)
# Lane/sublane-dense (rows, 128) slab, pipelined grid reduction accumulating
# into the resident (1,1) output block.
# ----------------------------------------------------------------------------
def _reg_kernel(p_ref, out_ref, *, use_abs):
    @pl.when(pl.program_id(0) == 0)
    def _():
        out_ref[...] = jnp.zeros_like(out_ref)

    x = p_ref[...]
    val = jnp.abs(x) if use_abs else x * x
    out_ref[...] = out_ref[...] + jnp.sum(val)


def apply_reg(p, reg_type="l2", *, max_block_rows=1024):
    if reg_type not in ("l1", "l2"):
        raise ValueError("bad reg")
    pf = p.reshape(-1).astype(jnp.float32)
    N = pf.shape[0]
    rows = pl.cdiv(N, _LANES)
    rows8 = _round_up(rows, 8)
    block_rows = min(max_block_rows, rows8)
    padded_rows = _round_up(rows, block_rows)
    pf = jnp.pad(pf, (0, padded_rows * _LANES - N))   # zeros contribute 0 to |.| and .^2
    p2 = pf.reshape(padded_rows, _LANES)

    kernel = functools.partial(_reg_kernel, use_abs=(reg_type == "l1"))
    out = pl.pallas_call(
        kernel,
        out_shape=jax.ShapeDtypeStruct((1, 1), jnp.float32),
        grid=(padded_rows // block_rows,),
        in_specs=[pl.BlockSpec((block_rows, _LANES), lambda i: (i, 0))],
        out_specs=pl.BlockSpec((1, 1), lambda i: (0, 0)),
        compiler_params=pltpu.CompilerParams(
            dimension_semantics=("arbitrary",),
            vmem_limit_bytes=_VMEM_LIMIT,
        ),
    )(p2)
    return out[0, 0]


def apply_reg_l2(p):
    return apply_reg(p, "l2")


# ----------------------------------------------------------------------------
# Pure-JAX references for validation.
# ----------------------------------------------------------------------------
def _ref_nll(x, mu, std, mask):
    nll = 0.5 * jnp.log(2.0 * jnp.pi) + jnp.log(std) + (mu - x) ** 2 / (2.0 * std ** 2)
    return nll * mask


def _ref_masks(M):
    msum = M.sum(-1)
    rc = jnp.flip(jnp.cumsum(jnp.flip(msum, axis=1), axis=1), axis=1)
    m_t = (rc > 1.0).astype(jnp.int32)
    m_g_t = (m_t.sum(-1) > 1).astype(jnp.float32)
    lens = m_t.sum(-1)
    return m_t, m_g_t, lens


if __name__ == "__main__":
    key = jax.random.PRNGKey(0)
    B, T, D = 2, 8, 16  # small shapes: batch=2, seq=8, features=16

    k1, k2, k3, k4, k5, k6 = jax.random.split(key, 6)
    x = jax.random.normal(k1, (B, T, D), dtype=jnp.float32)
    mu = jax.random.normal(k2, (B, T, D), dtype=jnp.float32)
    std = jax.nn.softplus(jax.random.normal(k3, (B, T, D), dtype=jnp.float32)) + 0.1
    mask = (jax.random.uniform(k4, (B, T, D)) > 0.3).astype(jnp.float32)
    # Observation mask M: like clinical follow-up data
    M = (jax.random.uniform(k5, (B, T, D)) > 0.2).astype(jnp.float32)
    p = jax.random.normal(k6, (4, 32), dtype=jnp.float32)  # a "parameter" tensor

    # Run Pallas kernels
    nll_out = masked_gaussian_nll_3d(x, mu, std, mask)
    m_t, m_g_t, lens = get_masks(M)
    reg_l2 = apply_reg(p, "l2")
    reg_l1 = apply_reg(p, "l1")

    jax.block_until_ready((nll_out, m_t, m_g_t, lens, reg_l2, reg_l1))

    # Validate against pure-JAX references
    assert jnp.allclose(nll_out, _ref_nll(x, mu, std, mask), atol=1e-5, rtol=1e-5)
    rm_t, rm_g_t, rlens = _ref_masks(M)
    assert jnp.array_equal(m_t, rm_t)
    assert jnp.array_equal(m_g_t, rm_g_t)
    assert jnp.array_equal(lens, rlens.astype(jnp.int32))
    assert jnp.allclose(reg_l2, jnp.sum(p ** 2), atol=1e-4, rtol=1e-5)
    assert jnp.allclose(reg_l1, jnp.sum(jnp.abs(p)), atol=1e-4, rtol=1e-5)

    print("KERNEL_OK")
</pallas_src>

<mosaic_0001>
module attributes {stable_mosaic.version = 11 : i64} {
  func.func @_nll_kernel(%arg0: i32, %arg1: memref<8x128xf32, #tpu.memory_space<vmem>>, %arg2: memref<8x128xf32, #tpu.memory_space<vmem>>, %arg3: memref<8x128xf32, #tpu.memory_space<vmem>>, %arg4: memref<8x128xf32, #tpu.memory_space<vmem>>, %arg5: memref<8x128xf32, #tpu.memory_space<vmem>>) attributes {dimension_semantics = [#tpu.dimension_semantics<parallel>], iteration_bounds = array<i64: 1>, scalar_prefetch = 0 : i64, scratch_operands = 0 : i64, tpu.core_type = #tpu.core_type<tc>, window_params = [{transform_indices = @transform_0, window_bounds = array<i64: 8, 128>}, {transform_indices = @transform_1, window_bounds = array<i64: 8, 128>}, {transform_indices = @transform_2, window_bounds = array<i64: 8, 128>}, {transform_indices = @transform_3, window_bounds = array<i64: 8, 128>}, {transform_indices = @transform_4, window_bounds = array<i64: 8, 128>}]} {
    %c0 = arith.constant 0 : index
    %c0_0 = arith.constant 0 : index
    %0 = vector.load %arg1[%c0, %c0_0] : memref<8x128xf32, #tpu.memory_space<vmem>>, vector<8x128xf32>
    %c0_1 = arith.constant 0 : index
    %c0_2 = arith.constant 0 : index
    %1 = vector.load %arg2[%c0_1, %c0_2] : memref<8x128xf32, #tpu.memory_space<vmem>>, vector<8x128xf32>
    %c0_3 = arith.constant 0 : index
    %c0_4 = arith.constant 0 : index
    %2 = vector.load %arg3[%c0_3, %c0_4] : memref<8x128xf32, #tpu.memory_space<vmem>>, vector<8x128xf32>
    %c0_5 = arith.constant 0 : index
    %c0_6 = arith.constant 0 : index
    %3 = vector.load %arg4[%c0_5, %c0_6] : memref<8x128xf32, #tpu.memory_space<vmem>>, vector<8x128xf32>
    %cst = arith.constant 6.28318548 : f32
    %4 = math.log %cst : f32
    %cst_7 = arith.constant 5.000000e-01 : f32
    %5 = arith.mulf %cst_7, %4 : f32
    %6 = tpu.reciprocal %2 : vector<8x128xf32> -> vector<8x128xf32>
    %7 = arith.subf %1, %0 : vector<8x128xf32>
    %8 = arith.mulf %7, %6 : vector<8x128xf32>
    %9 = math.log %2 : vector<8x128xf32>
    %10 = vector.broadcast %5 : f32 to vector<8x128xf32>
    %11 = arith.addf %10, %9 : vector<8x128xf32>
    %cst_8 = arith.constant 5.000000e-01 : f32
    %12 = vector.broadcast %cst_8 : f32 to vector<8x128xf32>
    %13 = arith.mulf %12, %8 : vector<8x128xf32>
    %14 = arith.mulf %13, %8 : vector<8x128xf32>
    %15 = arith.addf %11, %14 : vector<8x128xf32>
    %16 = arith.mulf %15, %3 : vector<8x128xf32>
    %c0_9 = arith.constant 0 : index
    %c0_10 = arith.constant 0 : index
    %17 = vector.load %arg5[%c0_9, %c0_10] : memref<8x128xf32, #tpu.memory_space<vmem>>, vector<8x128xf32>
    tpu.vector_store %arg5[%c0_9, %c0_10], %16 {strides = array<i32>} : memref<8x128xf32, #tpu.memory_space<vmem>>, vector<8x128xf32>,
    return
  }
  func.func @transform_0(%arg0: i32) -> (i32, i32) {
    %c0_i32 = arith.constant 0 : i32
    %c0_i32_0 = arith.constant 0 : i32
    return %arg0, %c0_i32 : i32, i32
  }
  func.func @transform_1(%arg0: i32) -> (i32, i32) {
    %c0_i32 = arith.constant 0 : i32
    %c0_i32_0 = arith.constant 0 : i32
    return %arg0, %c0_i32 : i32, i32
  }
  func.func @transform_2(%arg0: i32) -> (i32, i32) {
    %c0_i32 = arith.constant 0 : i32
    %c0_i32_0 = arith.constant 0 : i32
    return %arg0, %c0_i32 : i32, i32
  }
  func.func @transform_3(%arg0: i32) -> (i32, i32) {
    %c0_i32 = arith.constant 0 : i32
    %c0_i32_0 = arith.constant 0 : i32
    return %arg0, %c0_i32 : i32, i32
  }
  func.func @transform_4(%arg0: i32) -> (i32, i32) {
    %c0_i32 = arith.constant 0 : i32
    %c0_i32_0 = arith.constant 0 : i32
    return %arg0, %c0_i32 : i32, i32
  }
}

</mosaic_0001>

<llo_original>
// kernel: tpu_custom_call.1
$region0: #{tpu_custom_call.1}
  #allocation0 [shape = 'u32[]', space=smem, size = 0x4, offset = 0x4, fixed_abs, tag = 'smem constant byte address 0x4 - core index']
  #allocation1 [shape = 'u32[144,128]{1,0:T(1,128)}', space=vmem, size = 0x12000, scoped, tag = 'internal scratch']
  %s0 = inlined_call_operand.hbm [shape: f32[8,128], index: 0, kind: input, shape index: {}]
  %s1 = inlined_call_operand.hbm [shape: f32[8,128], index: 1, kind: input, shape index: {}]
  %s2 = inlined_call_operand.hbm [shape: f32[8,128], index: 2, kind: input, shape index: {}]
  %s3 = inlined_call_operand.vmem [shape: f32[8,128], index: 3, kind: input, shape index: {}]
  %s4 = inlined_call_operand.hbm [shape: f32[8,128], index: 4, kind: output, shape index: {}]
  %s5 = sld [smem:[#allocation0]]
  $region38: #{tpu_custom_call.1} parent=0
    _
  %s7 = ssub.s32 1, %s5
  %s8 = scalar_select 0, %s7, %s5
  $region1: #{tpu_custom_call.1} parent=0
    #allocation2 [shape = 'u8[4096]{0}', space=vmem, size = 0x1000, scoped, tag = 'input window, operand 0, single buffered']
    #allocation3 [shape = 's32[1]{0}', space=sflag, size = 0x4, scoped, tag = 'scoped memory for tpu_custom_call.1']
    #allocation4 [shape = 's32[1]{0}', space=sflag, size = 0x4, scoped, tag = 'scoped memory for tpu_custom_call.1']
    #allocation5 [shape = 'u8[4096]{0}', space=vmem, size = 0x1000, scoped, tag = 'input window, operand 1, single buffered']
    #allocation6 [shape = 's32[1]{0}', space=sflag, size = 0x4, scoped, tag = 'scoped memory for tpu_custom_call.1']
    #allocation7 [shape = 'u8[4096]{0}', space=vmem, size = 0x1000, scoped, tag = 'input window, operand 2, single buffered']
    #allocation8 [shape = 'u8[4096]{0}', space=vmem, size = 0x1000, scoped, tag = 'output window, operand 0, single buffered']
    %9 = vsyncpa [#allocation3], 0
    %10 = vsyncpa [#allocation6], 0
    %11 = vsyncpa [#allocation4], 0
    // Predicated region
    $region2: #{tpu_custom_call.1} parent=1 // pred_check
      _
    $region3: #{tpu_custom_call.1} parent=1 // pred_check_branch
      %13 = sbr.rel (0) target = $region5
    $region4: #{tpu_custom_call.1} parent=1 // pred_region
      %s15 = ssub.s32 128, 128
      %16 = vsyncadd [#allocation3], %s15
      %s18 = sshll.u32 [#allocation2], 4
      %s19 = int_to_ptr.vmem [resolvable:$true] %s18
      %21 = dma.hbm_to_vmem [thread:$0]  %s0, 128, %s19, [#allocation3]
    $region5: #{tpu_custom_call.1} parent=1 // pred_fallthru
      _
    // Predicated region
    $region6: #{tpu_custom_call.1} parent=1 // pred_check
      _
    $region7: #{tpu_custom_call.1} parent=1 // pred_check_branch
      %23 = sbr.rel (0) target = $region9
    $region8: #{tpu_custom_call.1} parent=1 // pred_region
      %s25 = ssub.s32 128, 128
      %26 = vsyncadd [#allocation6], %s25
      %s28 = sshll.u32 [#allocation5], 4
      %s29 = int_to_ptr.vmem [resolvable:$true] %s28
      %31 = dma.hbm_to_vmem [thread:$0]  %s1, 128, %s29, [#allocation6]
    $region9: #{tpu_custom_call.1} parent=1 // pred_fallthru
      _
    // Predicated region
    $region10: #{tpu_custom_call.1} parent=1 // pred_check
      _
    $region11: #{tpu_custom_call.1} parent=1 // pred_check_branch
      %33 = sbr.rel (0) target = $region13
    $region12: #{tpu_custom_call.1} parent=1 // pred_region
      %s35 = ssub.s32 128, 128
      %36 = vsyncadd [#allocation6], %s35
      %s38 = sshll.u32 [#allocation7], 4
      %s39 = int_to_ptr.vmem [resolvable:$true] %s38
      %41 = dma.hbm_to_vmem [thread:$0]  %s2, 128, %s39, [#allocation6]
    $region13: #{tpu_custom_call.1} parent=1 // pred_fallthru
      _
    // Predicated region
    $region14: #{tpu_custom_call.1} parent=1 // pred_check
      _
    $region15: #{tpu_custom_call.1} parent=1 // pred_check_branch
      %43 = sbr.rel (0) target = $region17
    $region16: #{tpu_custom_call.1} parent=1 // pred_region
      _
    $region17: #{tpu_custom_call.1} parent=1 // pred_fallthru
      _
    // Predicated region
    $region18: #{tpu_custom_call.1} parent=1 // pred_check
      _
    $region19: #{tpu_custom_call.1} parent=1 // pred_check_branch
      %45 = sbr.rel (0) target = $region21
    $region20: #{tpu_custom_call.1} parent=1 // pred_region
      %46 = dma.done [#allocation3], 128
    $region21: #{tpu_custom_call.1} parent=1 // pred_fallthru
      _
    // Predicated region
    $region22: #{tpu_custom_call.1} parent=1 // pred_check
      _
    $region23: #{tpu_custom_call.1} parent=1 // pred_check_branch
      %48 = sbr.rel (0) target = $region25
    $region24: #{tpu_custom_call.1} parent=1 // pred_region
      %49 = dma.done [#allocation6], 128
    $region25: #{tpu_custom_call.1} parent=1 // pred_fallthru
      _
    // Predicated region
    $region26: #{tpu_custom_call.1} parent=1 // pred_check
      _
    $region27: #{tpu_custom_call.1} parent=1 // pred_check_branch
      %51 = sbr.rel (0) target = $region29
    $region28: #{tpu_custom_call.1} parent=1 // pred_region
      %52 = dma.done [#allocation6], 128
    $region29: #{tpu_custom_call.1} parent=1 // pred_fallthru
      _
    %v53 = vld [vmem:[#allocation2] sm:$0xff]
    %v54 = vld [vmem:[#allocation5] sm:$0xff]
    %v55 = vld [vmem:[#allocation7] sm:$0xff]
    %v56 = vld [vmem:[%s3] sm:$0xff]
    %v57 = vrcp.pop %v55
    %v58 = vsub.f32 %v54, %v53
    %v59 = vmul.f32 %v58, %v57
    %v60 = vlog2.pop %v55
    %v61 = vmul.f32 %v60, 0.6931472
    %v62 = vadd.f32 %v61, 0.9189385
    %v63 = vmul.f32 %v59, 0.5
    %v64 = vmul.f32 %v63, %v59
    %v65 = vadd.f32 %v62, %v64
    %v66 = vmul.f32 %v65, %v56
    %67 = vst [vmem:[#allocation8] sm:$0xff] %v66
    // Predicated region
    $region30: #{tpu_custom_call.1} parent=1 // pred_check
      _
    $region31: #{tpu_custom_call.1} parent=1 // pred_check_branch
      %69 = sbr.rel (0) target = $region33
    $region32: #{tpu_custom_call.1} parent=1 // pred_region
      %s71 = ssub.s32 128, 128
      %72 = vsyncadd [#allocation4], %s71
      %s74 = sshll.u32 [#allocation8], 4
      %s75 = int_to_ptr.vmem [resolvable:$true] %s74
      %77 = dma.vmem_to_hbm [thread:$0]  %s75, 128, %s4, [#allocation4]
    $region33: #{tpu_custom_call.1} parent=1 // pred_fallthru
      _
    // Predicated region
    $region34: #{tpu_custom_call.1} parent=1 // pred_check
      _
    $region35: #{tpu_custom_call.1} parent=1 // pred_check_branch
      %79 = sbr.rel (0) target = $region37
    $region36: #{tpu_custom_call.1} parent=1 // pred_region
      %80 = dma.done [#allocation4], 128
    $region37: #{tpu_custom_call.1} parent=1 // pred_fallthru
      _
    %81 = vsyncpa [#allocation3], 1
    %82 = vsyncpa [#allocation6], 1
    %83 = vsyncpa [#allocation4], 1

</llo_original>
